<compile_context>
chip_gen: v7x
topology: tpu7x:2x2x1
jax: 0.10.0
libtpu: 0.0.40
codegen_flags: <defaults>
</compile_context>

<pallas_src>
import math

import jax
import jax.numpy as jnp
from jax.experimental import pallas as pl
from jax.experimental.pallas import tpu as pltpu

_LOG_2PI = math.log(2.0 * math.pi)


def _round_up(v, m):
    return (v + m - 1) // m * m


# ----------------------------------------------------------------------------
# Kernel: tiled x @ W with fused bias + reparameterized-sample epilogue.
# Accumulates directly into the output block, which is resident across the
# K ("arbitrary") grid axis because its index map ignores k.
# ----------------------------------------------------------------------------
def _densfunc_matmul_kernel(x_ref, w_ref, bs_ref, eps_ref, out_ref):
    k = pl.program_id(2)

    @pl.when(k == 0)
    def _():
        # Fold the bias into the accumulator init (saves an epilogue add).
        out_ref[...] = jnp.broadcast_to(bs_ref[0:1, :], out_ref.shape)

    out_ref[...] += jnp.dot(x_ref[...], w_ref[...],
                            preferred_element_type=jnp.float32)

    @pl.when(k == pl.num_programs(2) - 1)
    def _():
        # sample = logits + std * eps   (eps consumed at native width)
        out_ref[...] += bs_ref[1:2, :] * eps_ref[...].astype(jnp.float32)


# ----------------------------------------------------------------------------
# log_prob evaluated at the mean: independent of logits / x / W.
# ----------------------------------------------------------------------------
def _log_prob(std, batch, outputs, binary):
    std_f32 = std.astype(jnp.float32)
    if binary:
        # Normal(logits, std).log_prob(logits) -> (B, O)
        return jnp.broadcast_to(-jnp.log(std_f32) - 0.5 * _LOG_2PI,
                                (batch, outputs))
    # MultivariateNormal(logits, diag(std)).log_prob(logits) -> (B,)
    return jnp.broadcast_to(
        -jnp.sum(jnp.log(std_f32)) - 0.5 * outputs * _LOG_2PI, (batch,))


def _xla_forward(x, w, b, std, eps, binary, compute_dtype):
    """Small-shape fast path: let XLA fuse dot + epilogue (no kernel launch)."""
    logits = jnp.dot(x.astype(compute_dtype), w.astype(compute_dtype),
                     preferred_element_type=jnp.float32) + b.astype(jnp.float32)
    sample = logits + std.astype(jnp.float32) * eps.astype(jnp.float32)
    B, O = logits.shape
    return sample, _log_prob(std, B, O, binary)


def dens_func_forward(x, w, b, std, eps, *, binary: bool = False,
                      compute_dtype=jnp.bfloat16,
                      tm_max: int = 256, tn_max: int = 512, tk_max: int = 512,
                      small_flops_threshold: int = 1 << 21):
    """Forward pass of DensFuncModel.

    x:(B,I)  w:(I,O)  b:(O,)  std:(O,)  eps:(B,O)  ->  (sample, l_prob)
    Pass eps as bfloat16 to halve its HBM stream (cast to f32 in-kernel).
    """
    B, I = x.shape
    O = w.shape[1]
    assert w.shape[0] == I and b.shape == (O,) and std.shape == (O,)
    assert eps.shape == (B, O)

    # ---- small-shape fast path ----------------------------------------------
    if 2 * B * I * O < small_flops_threshold:
        return _xla_forward(x, w, b, std, eps, binary, compute_dtype)

    # ---- tile selection: 16-sublane safe for bf16, 128-lane dense ------------
    tm = min(tm_max, _round_up(B, 16))
    tn = min(tn_max, _round_up(O, 128))
    tk = min(tk_max, _round_up(I, 128))
    # v7x megacore: if the whole batch fits one M tile, split N into >= 2 tiles
    # so both TensorCores get a "parallel" block.
    if pl.cdiv(B, tm) == 1 and O > 128:
        tn = min(tn, max(128, _round_up((O + 1) // 2, 128)))

    Bp, Ip, Op = _round_up(B, tm), _round_up(I, tk), _round_up(O, tn)
    grid = (Bp // tm, Op // tn, Ip // tk)

    if grid[0] * grid[1] * grid[2] == 1:
        # Single-tile problem: pipeline/launch overhead dwarfs the matmul.
        return _xla_forward(x, w, b, std, eps, binary, compute_dtype)

    # ---- cast (bf16 MXU operands) and pad ONLY when unaligned ----------------
    # (W is a parameter; ideally the caller pre-casts/pads it once.)
    x_c = x.astype(compute_dtype)
    w_c = w.astype(compute_dtype)
    if (Bp, Ip) != (B, I):
        x_c = jnp.pad(x_c, ((0, Bp - B), (0, Ip - I)))
    if (Ip, Op) != (I, O):
        w_c = jnp.pad(w_c, ((0, Ip - I), (0, Op - O)))
    bs = jnp.stack([b.astype(jnp.float32), std.astype(jnp.float32)])   # (2, O)
    if Op != O:
        bs = jnp.pad(bs, ((0, 0), (0, Op - O)))
    eps_c = eps
    if (Bp, Op) != (B, O):
        eps_c = jnp.pad(eps_c, ((0, Bp - B), (0, Op - O)))

    # ---- explicit VMEM budget (v5e default scoped limit is only 16 MiB) ------
    it_c = jnp.dtype(compute_dtype).itemsize
    it_e = eps_c.dtype.itemsize
    vmem_est = 2 * (tm * tk * it_c + tk * tn * it_c + tm * tn * it_e
                    + 2 * tn * 4 + tm * tn * 4)
    vmem_limit = int(min(max(4 * vmem_est, 32 * 1024 * 1024), 48 * 1024 * 1024))

    cost = pl.CostEstimate(
        flops=2 * Bp * Ip * Op,
        transcendentals=0,
        bytes_accessed=(x_c.size * it_c + w_c.size * it_c + eps_c.size * it_e
                        + bs.size * 4 + Bp * Op * 4))

    sample_p = pl.pallas_call(
        _densfunc_matmul_kernel,
        out_shape=jax.ShapeDtypeStruct((Bp, Op), jnp.float32),
        grid_spec=pltpu.PrefetchScalarGridSpec(
            num_scalar_prefetch=0,
            grid=grid,
            in_specs=[
                pl.BlockSpec((tm, tk), lambda i, j, k: (i, k)),   # x tile
                # TODO(synk): add pipeline_mode=pl.Buffered(3) on W if xprof
                #             shows its DMA exposed at large tk.
                pl.BlockSpec((tk, tn), lambda i, j, k: (k, j)),   # W tile
                pl.BlockSpec((2, tn), lambda i, j, k: (0, j)),    # [bias; std]
                pl.BlockSpec((tm, tn), lambda i, j, k: (i, j)),   # eps (k-resident)
            ],
            out_specs=pl.BlockSpec((tm, tn), lambda i, j, k: (i, j)),
        ),
        compiler_params=pltpu.CompilerParams(
            dimension_semantics=("parallel", "parallel", "arbitrary"),
            vmem_limit_bytes=vmem_limit),
        cost_estimate=cost,
    )(x_c, w_c, bs, eps_c)

    sample = sample_p if (Bp, Op) == (B, O) else sample_p[:B, :O]
    return sample, _log_prob(std, B, O, binary)


# ----------------------------------------------------------------------------
# Plain-JAX reference with the same numerics (bf16 MXU operands, f32 accum).
# ----------------------------------------------------------------------------
def _reference(x, w, b, std, eps, binary, compute_dtype=jnp.bfloat16):
    logits = jnp.dot(x.astype(compute_dtype), w.astype(compute_dtype),
                     preferred_element_type=jnp.float32) + b.astype(jnp.float32)
    sample = logits + std.astype(jnp.float32) * eps.astype(jnp.float32)
    B, O = logits.shape
    return sample, _log_prob(std, B, O, binary)


if __name__ == "__main__":
    key = jax.random.PRNGKey(0)
    k1, k2, k3, k4, k5, k6 = jax.random.split(key, 6)

    # ---- small shapes consistent with the module (32 signals -> 16 outputs) --
    # These take the XLA fast path (single-tile / sub-MFLOP problem).
    B, IN, OUT = 8, 32, 16
    x = jax.random.normal(k1, (B, IN), dtype=jnp.float32)
    w = 0.1 * jax.random.normal(k2, (IN, OUT), dtype=jnp.float32)
    b = 0.01 * jax.random.normal(k3, (OUT,), dtype=jnp.float32)
    std = jnp.ones((OUT,), dtype=jnp.float32)          # self.std = torch.ones(outputs)
    eps = jax.random.normal(k4, (B, OUT), dtype=jnp.float32)

    for binary in (False, True):
        s, lp = dens_func_forward(x, w, b, std, eps, binary=binary)
        jax.block_until_ready((s, lp))
        rs, rl = _reference(x, w, b, std, eps, binary)
        assert s.shape == rs.shape and lp.shape == rl.shape
        assert jnp.allclose(s, rs, atol=1e-3, rtol=1e-3), "sample mismatch (fast path)"
        assert jnp.allclose(lp, rl, atol=1e-5, rtol=1e-5), "log_prob mismatch (fast path)"

    # ---- lane/sublane-aligned shape that exercises the Pallas kernel path ----
    B2, IN2, OUT2 = 128, 256, 256
    x2 = jax.random.normal(k5, (B2, IN2), dtype=jnp.float32)
    w2 = 0.05 * jax.random.normal(k6, (IN2, OUT2), dtype=jnp.float32)
    b2 = jnp.zeros((OUT2,), dtype=jnp.float32)
    std2 = jnp.ones((OUT2,), dtype=jnp.float32)
    eps2 = jax.random.normal(jax.random.PRNGKey(1),
                             (B2, OUT2), dtype=jnp.float32).astype(jnp.bfloat16)

    for binary in (False, True):
        s2, lp2 = dens_func_forward(x2, w2, b2, std2, eps2, binary=binary)
        jax.block_until_ready((s2, lp2))
        rs2, rl2 = _reference(x2, w2, b2, std2, eps2, binary)
        assert s2.shape == rs2.shape and lp2.shape == rl2.shape
        assert jnp.allclose(s2, rs2, atol=2e-3, rtol=2e-3), "sample mismatch (kernel path)"
        assert jnp.allclose(lp2, rl2, atol=1e-5, rtol=1e-5), "log_prob mismatch (kernel path)"

    print("KERNEL_OK")
</pallas_src>

<mosaic_0001>
module attributes {stable_mosaic.version = 11 : i64} {
  func.func @_densfunc_matmul_kernel(%arg0: i32, %arg1: i32, %arg2: i32, %arg3: memref<128x256xbf16, #tpu.memory_space<vmem>>, %arg4: memref<256x128xbf16, #tpu.memory_space<vmem>>, %arg5: memref<2x128xf32, #tpu.memory_space<vmem>>, %arg6: memref<128x128xbf16, #tpu.memory_space<vmem>>, %arg7: memref<128x128xf32, #tpu.memory_space<vmem>>) attributes {dimension_semantics = [#tpu.dimension_semantics<parallel>, #tpu.dimension_semantics<parallel>, #tpu.dimension_semantics<arbitrary>], iteration_bounds = array<i64: 1, 2, 1>, scalar_prefetch = 0 : i64, scratch_operands = 0 : i64, tpu.core_type = #tpu.core_type<tc>, window_params = [{transform_indices = @transform_0, window_bounds = array<i64: 128, 256>}, {transform_indices = @transform_1, window_bounds = array<i64: 256, 128>}, {transform_indices = @transform_2, window_bounds = array<i64: 2, 128>}, {transform_indices = @transform_3, window_bounds = array<i64: 128, 128>}, {transform_indices = @transform_4, window_bounds = array<i64: 128, 128>}]} {
    %c0_i32 = arith.constant 0 : i32
    %0 = arith.cmpi eq, %arg2, %c0_i32 : i32
    %1 = arith.extui %0 : i1 to i32
    %c0_i32_0 = arith.constant 0 : i32
    %2 = arith.cmpi ne, %1, %c0_i32_0 : i32
    scf.if %2 {
      %c0_10 = arith.constant 0 : index
      %c0_11 = arith.constant 0 : index
      %12 = vector.load %arg5[%c0_10, %c0_11] : memref<2x128xf32, #tpu.memory_space<vmem>>, vector<1x128xf32>
      %13 = vector.shape_cast %12 : vector<1x128xf32> to vector<1x128xf32>
      %14 = vector.broadcast %13 : vector<1x128xf32> to vector<128x128xf32>
      %c0_12 = arith.constant 0 : index
      %c0_13 = arith.constant 0 : index
      %15 = vector.load %arg7[%c0_12, %c0_13] : memref<128x128xf32, #tpu.memory_space<vmem>>, vector<128x128xf32>
      tpu.vector_store %arg7[%c0_12, %c0_13], %14 {strides = array<i32>} : memref<128x128xf32, #tpu.memory_space<vmem>>, vector<128x128xf32>,
    } else {
    }
    %c0 = arith.constant 0 : index
    %c0_1 = arith.constant 0 : index
    %3 = vector.load %arg7[%c0, %c0_1] : memref<128x128xf32, #tpu.memory_space<vmem>>, vector<128x128xf32>
    %c0_2 = arith.constant 0 : index
    %c0_3 = arith.constant 0 : index
    %4 = vector.load %arg3[%c0_2, %c0_3] : memref<128x256xbf16, #tpu.memory_space<vmem>>, vector<128x256xbf16>
    %c0_4 = arith.constant 0 : index
    %c0_5 = arith.constant 0 : index
    %5 = vector.load %arg4[%c0_4, %c0_5] : memref<256x128xbf16, #tpu.memory_space<vmem>>, vector<256x128xbf16>
    %cst = arith.constant dense<0.000000e+00> : vector<128x128xf32>
    %6 = tpu.matmul %4, %5, %cst {dimension_numbers = #tpu.dot_dimension_numbers<[1], [0], [0], [1], [0, 0, 1, 1], [], []>} : vector<128x256xbf16>, vector<256x128xbf16>, vector<128x128xf32> -> vector<128x128xf32>
    %7 = arith.addf %3, %6 : vector<128x128xf32>
    %c0_6 = arith.constant 0 : index
    %c0_7 = arith.constant 0 : index
    %8 = vector.load %arg7[%c0_6, %c0_7] : memref<128x128xf32, #tpu.memory_space<vmem>>, vector<128x128xf32>
    tpu.vector_store %arg7[%c0_6, %c0_7], %7 {strides = array<i32>} : memref<128x128xf32, #tpu.memory_space<vmem>>, vector<128x128xf32>,
    %c0_i32_8 = arith.constant 0 : i32
    %9 = arith.cmpi eq, %arg2, %c0_i32_8 : i32
    %10 = arith.extui %9 : i1 to i32
    %c0_i32_9 = arith.constant 0 : i32
    %11 = arith.cmpi ne, %10, %c0_i32_9 : i32
    scf.if %11 {
      %c0_10 = arith.constant 0 : index
      %c0_11 = arith.constant 0 : index
      %12 = vector.load %arg7[%c0_10, %c0_11] : memref<128x128xf32, #tpu.memory_space<vmem>>, vector<128x128xf32>
      %c1 = arith.constant 1 : index
      %c0_12 = arith.constant 0 : index
      %13 = vector.load %arg5[%c1, %c0_12] : memref<2x128xf32, #tpu.memory_space<vmem>>, vector<1x128xf32>
      %c0_13 = arith.constant 0 : index
      %c0_14 = arith.constant 0 : index
      %14 = vector.load %arg6[%c0_13, %c0_14] : memref<128x128xbf16, #tpu.memory_space<vmem>>, vector<128x128xbf16>
      %15 = arith.extf %14 : vector<128x128xbf16> to vector<128x128xf32>
      %16 = vector.broadcast %13 : vector<1x128xf32> to vector<128x128xf32>
      %17 = arith.mulf %16, %15 : vector<128x128xf32>
      %18 = arith.addf %12, %17 : vector<128x128xf32>
      %c0_15 = arith.constant 0 : index
      %c0_16 = arith.constant 0 : index
      %19 = vector.load %arg7[%c0_15, %c0_16] : memref<128x128xf32, #tpu.memory_space<vmem>>, vector<128x128xf32>
      tpu.vector_store %arg7[%c0_15, %c0_16], %18 {strides = array<i32>} : memref<128x128xf32, #tpu.memory_space<vmem>>, vector<128x128xf32>,
    } else {
    }
    return
  }
  func.func @transform_0(%arg0: i32, %arg1: i32, %arg2: i32) -> (i32, i32) {
    %c0_i32 = arith.constant 0 : i32
    return %arg0, %arg2 : i32, i32
  }
  func.func @transform_1(%arg0: i32, %arg1: i32, %arg2: i32) -> (i32, i32) {
    %c0_i32 = arith.constant 0 : i32
    return %arg2, %arg1 : i32, i32
  }
  func.func @transform_2(%arg0: i32, %arg1: i32, %arg2: i32) -> (i32, i32) {
    %c0_i32 = arith.constant 0 : i32
    %c0_i32_0 = arith.constant 0 : i32
    return %c0_i32, %arg1 : i32, i32
  }
  func.func @transform_3(%arg0: i32, %arg1: i32, %arg2: i32) -> (i32, i32) {
    %c0_i32 = arith.constant 0 : i32
    return %arg0, %arg1 : i32, i32
  }
  func.func @transform_4(%arg0: i32, %arg1: i32, %arg2: i32) -> (i32, i32) {
    %c0_i32 = arith.constant 0 : i32
    return %arg0, %arg1 : i32, i32
  }
}

</mosaic_0001>

<llo_original>
// kernel: tpu_custom_call.1
$region0: #{tpu_custom_call.1}
  #allocation0 [shape = 'u32[]', space=smem, size = 0x4, offset = 0x4, fixed_abs, tag = 'smem constant byte address 0x4 - core index']
  #allocation1 [shape = 'u32[144,128]{1,0:T(1,128)}', space=vmem, size = 0x12000, scoped, tag = 'internal scratch']
  %s0 = inlined_call_operand.hbm [shape: bf16[128,256], index: 0, kind: input, shape index: {}]
  %s1 = inlined_call_operand.hbm [shape: bf16[256,256], index: 1, kind: input, shape index: {}]
  %s2 = inlined_call_operand.vmem [shape: f32[2,256], index: 2, kind: input, shape index: {}]
  %s3 = inlined_call_operand.hbm [shape: bf16[128,256], index: 3, kind: input, shape index: {}]
  %s4 = inlined_call_operand.hbm [shape: f32[128,256], index: 4, kind: output, shape index: {}]
  %s5 = sld [smem:[#allocation0]]
  $region69: #{tpu_custom_call.1} parent=0
    _
  %s7 = ssub.s32 1, %s5
  %s8 = scalar_select 0, %s7, %s5
  $region1: #{tpu_custom_call.1} parent=0
    #allocation2 [shape = 'u8[65536]{0}', space=vmem, size = 0x10000, scoped, tag = 'input window, operand 0, single buffered']
    #allocation3 [shape = 's32[2]{0}', space=sflag, size = 0x8, scoped, tag = 'scoped memory for tpu_custom_call.1']
    #allocation4 [shape = 's32[2]{0}', space=sflag, size = 0x8, scoped, tag = 'scoped memory for tpu_custom_call.1']
    #allocation5 [shape = 'u8[131072]{0}', space=vmem, size = 0x20000, scoped, tag = 'input window, operand 1']
    #allocation6 [shape = 's32[2]{0}', space=sflag, size = 0x8, scoped, tag = 'scoped memory for tpu_custom_call.1']
    #allocation7 [shape = 'u8[65536]{0}', space=vmem, size = 0x10000, scoped, tag = 'input window, operand 3']
    #allocation8 [shape = 'u8[131072]{0}', space=vmem, size = 0x20000, scoped, tag = 'output window, operand 0']
    %9 = vsyncpa [#allocation3], 0
    %10 = vsyncpa [#allocation6], 0
    %s11 = scalar_lea.sflag [#allocation6], 1
    %12 = vsyncpa %s11, 0
    %13 = vsyncpa [#allocation4], 0
    %s14 = scalar_lea.sflag [#allocation4], 1
    %15 = vsyncpa %s14, 0
    loop: start=0, step=1, limit=4
    $region2: #{tpu_custom_call.1} parent=1 // loop_pre_header
      _
    $region3: #{tpu_custom_call.1} parent=1 // loop_header
      %s17 = sphi 0, %s21
      %p18 = scmp.ge.s32.totalorder %s17, 4
      %s24 = sphi 0, %s43
      %s25 = sphi 0, %s39
      %s26 = sphi 0, %s35
      %s27 = sphi 0, %s24
      %s28 = sphi 0, %s25
      %s29 = sphi 0, %s26
      %s30 = sphi 0, %s27
      %s31 = sphi 0, %s28
      %s32 = sphi 0, %s29
      %s48 = sphi 0, %s50
      %s51 = sphi 0, %s48
      %s52 = sphi 0, %s51
      %s68 = sphi 0, %s52
      %s76 = sphi 0, %s78
      %s79 = sphi 0, %s76
      %s80 = sphi 0, %s79
      %s96 = sphi 0, %s80
      %s102 = sphi 0, %s104
      %s105 = sphi 0, %s102
      %s106 = sphi 0, %s105
      %s122 = sphi 0, %s106
      %s130 = sphi 0, %s132
      %s133 = sphi 0, %s130
      %s134 = sphi 0, %s133
      %s150 = sphi 0, %s134
      %s158 = sphi 0, %s160
      %s161 = sphi 0, %s158
      %s162 = sphi 0, %s161
      %s178 = sphi 0, %s162
    $region4: #{tpu_custom_call.1} parent=1 // loop_header_branch
      %20 = sbr.rel (%p18) target = $region8
    $region5: #{tpu_custom_call.1} parent=1 // loop_body
      %s22 = ssub.s32 %s17, 1
      %s23 = ssub.s32 %s17, 2
      %s33 = sadd.s32 1, %s26
      %p34 = scmp.ge.s32.totalorder %s33, 1
      %s35 = scalar_select %p34, 0, %s33
      %s36 = sadd.s32 1, %s25
      %s37 = scalar_select %p34, %s36, %s25
      %p38 = scmp.ge.s32.totalorder %s37, 2
      %s39 = scalar_select %p38, 0, %s37
      %s40 = sadd.s32 1, %s24
      %s41 = scalar_select %p38, %s40, %s24
      %p42 = scmp.ge.s32.totalorder %s41, 1
      %s43 = scalar_select %p42, 0, %s41
      %s44 = ssub.s32 %s24, %s43
      %s45 = ssub.s32 %s26, %s35
      %s46 = sor.u32 %s44, %s45
      %p47 = scmp.eq.s32.totalorder %s46, 0
      %s49 = sadd.s32 %s48, 1
      %s50 = scalar_select %p47, %s48, %s49
      %p53 = pneg %p47
      %p54 = scmp.eq.s32.totalorder %s17, 1
      %p55 = por %p53, %p54
      %p56 = scmp.ne.s32.totalorder %s48, %s51
      %p57 = scmp.eq.s32.totalorder %s17, 0
      %p58 = por %p56, %p57
      %p59 = scmp.ne.s32.totalorder %s48, %s51
      %p60 = scmp.eq.s32.totalorder %s22, 1
      %p61 = por %p59, %p60
      %p62 = scmp.ne.s32.totalorder %s51, %s52
      %p63 = scmp.eq.s32.totalorder %s22, 0
      %p64 = por %p62, %p63
      %p65 = scmp.ne.s32.totalorder %s51, %s52
      %p66 = scmp.eq.s32.totalorder %s23, 1
      %p67 = por %p65, %p66
      %p69 = scmp.ne.s32.totalorder %s52, %s68
      %p70 = scmp.eq.s32.totalorder %s23, 0
      %p71 = por %p69, %p70
      %s72 = ssub.s32 %s26, %s35
      %s73 = ssub.s32 %s25, %s39
      %s74 = sor.u32 %s72, %s73
      %p75 = scmp.eq.s32.totalorder %s74, 0
      %s77 = sadd.s32 %s76, 1
      %s78 = scalar_select %p75, %s76, %s77
      %p81 = pneg %p75
      %p82 = scmp.eq.s32.totalorder %s17, 1
      %p83 = por %p81, %p82
      %p84 = scmp.ne.s32.totalorder %s76, %s79
      %p85 = scmp.eq.s32.totalorder %s17, 0
      %p86 = por %p84, %p85
      %p87 = scmp.ne.s32.totalorder %s76, %s79
      %p88 = scmp.eq.s32.totalorder %s22, 1
      %p89 = por %p87, %p88
      %p90 = scmp.ne.s32.totalorder %s79, %s80
      %p91 = scmp.eq.s32.totalorder %s22, 0
      %p92 = por %p90, %p91
      %p93 = scmp.ne.s32.totalorder %s79, %s80
      %p94 = scmp.eq.s32.totalorder %s23, 1
      %p95 = por %p93, %p94
      %p97 = scmp.ne.s32.totalorder %s80, %s96
      %p98 = scmp.eq.s32.totalorder %s23, 0
      %p99 = por %p97, %p98
      %s100 = ssub.s32 %s25, %s39
      %p101 = scmp.eq.s32.totalorder %s100, 0
      %s103 = sadd.s32 %s102, 1
      %s104 = scalar_select %p101, %s102, %s103
      %p107 = pneg %p101
      %p108 = scmp.eq.s32.totalorder %s17, 1
      %p109 = por %p107, %p108
      %p110 = scmp.ne.s32.totalorder %s102, %s105
      %p111 = scmp.eq.s32.totalorder %s17, 0
      %p112 = por %p110, %p111
      %p113 = scmp.ne.s32.totalorder %s102, %s105
      %p114 = scmp.eq.s32.totalorder %s22, 1
      %p115 = por %p113, %p114
      %p116 = scmp.ne.s32.totalorder %s105, %s106
      %p117 = scmp.eq.s32.totalorder %s22, 0
      %p118 = por %p116, %p117
      %p119 = scmp.ne.s32.totalorder %s105, %s106
      %p120 = scmp.eq.s32.totalorder %s23, 1
      %p121 = por %p119, %p120
      %p123 = scmp.ne.s32.totalorder %s106, %s122
      %p124 = scmp.eq.s32.totalorder %s23, 0
      %p125 = por %p123, %p124
      %s126 = ssub.s32 %s24, %s43
      %s127 = ssub.s32 %s25, %s39
      %s128 = sor.u32 %s126, %s127
      %p129 = scmp.eq.s32.totalorder %s128, 0
      %s131 = sadd.s32 %s130, 1
      %s132 = scalar_select %p129, %s130, %s131
      %p135 = pneg %p129
      %p136 = scmp.eq.s32.totalorder %s17, 1
      %p137 = por %p135, %p136
      %p138 = scmp.ne.s32.totalorder %s130, %s133
      %p139 = scmp.eq.s32.totalorder %s17, 0
      %p140 = por %p138, %p139
      %p141 = scmp.ne.s32.totalorder %s130, %s133
      %p142 = scmp.eq.s32.totalorder %s22, 1
      %p143 = por %p141, %p142
      %p144 = scmp.ne.s32.totalorder %s133, %s134
      %p145 = scmp.eq.s32.totalorder %s22, 0
      %p146 = por %p144, %p145
      %p147 = scmp.ne.s32.totalorder %s133, %s134
      %p148 = scmp.eq.s32.totalorder %s23, 1
      %p149 = por %p147, %p148
      %p151 = scmp.ne.s32.totalorder %s134, %s150
      %p152 = scmp.eq.s32.totalorder %s23, 0
      %p153 = por %p151, %p152
      %s154 = ssub.s32 %s24, %s43
      %s155 = ssub.s32 %s25, %s39
      %s156 = sor.u32 %s154, %s155
      %p157 = scmp.eq.s32.totalorder %s156, 0
      %s159 = sadd.s32 %s158, 1
      %s160 = scalar_select %p157, %s158, %s159
      %p163 = pneg %p157
      %p164 = scmp.eq.s32.totalorder %s17, 1
      %p165 = por %p163, %p164
      %p166 = scmp.ne.s32.totalorder %s158, %s161
      %p167 = scmp.eq.s32.totalorder %s17, 0
      %p168 = por %p166, %p167
      %p169 = scmp.ne.s32.totalorder %s158, %s161
      %p170 = scmp.eq.s32.totalorder %s22, 1
      %p171 = por %p169, %p170
      %p172 = scmp.ne.s32.totalorder %s161, %s162
      %p173 = scmp.eq.s32.totalorder %s22, 0
      %p174 = por %p172, %p173
      %p175 = scmp.ne.s32.totalorder %s161, %s162
      %p176 = scmp.eq.s32.totalorder %s23, 1
      %p177 = por %p175, %p176
      %p179 = scmp.ne.s32.totalorder %s162, %s178
      %p180 = scmp.eq.s32.totalorder %s23, 0
      %p181 = por %p179, %p180
      %p182 = scmp.le.s32.totalorder 1, %s17
      %p183 = scmp.lt.s32.totalorder %s17, 3
      %p184 = pnand %p182, %p183
      %p185 = pneg %p184
      // Predicated region
      $region9: #{tpu_custom_call.1} parent=5 // pred_check
        _
      $region10: #{tpu_custom_call.1} parent=5 // pred_check_branch
        %187 = sbr.rel (%p184) target = $region12
      $region11: #{tpu_custom_call.1} parent=5 // pred_region
        %s188 = ssub.s32 %s17, 1
        // Predicated region
        $region13: #{tpu_custom_call.1} parent=11 // pred_check
          %p189 = pneg %p64
        $region14: #{tpu_custom_call.1} parent=11 // pred_check_branch
          %191 = sbr.rel (%p189) target = $region16
        $region15: #{tpu_custom_call.1} parent=11 // pred_region
          %s192 = smul.u32 16, %s27
          %s193 = smul.u32 2, %s29
          %s195 = ssub.s32 2048, 2048
          %196 = vsyncadd [#allocation3], %s195
          %s197 = smul.addr %s192, 2
          %s198 = sadd.s32 %s193, %s197
          %s199 = smul.addr %s198, 64
          %s200 = scalar_lea.hbm %s0, %s199
          %s201 = sshll.u32 [#allocation2], 4
          %s202 = int_to_ptr.vmem [resolvable:$true] %s201
          %207 = dma.hbm_to_vmem [thread:$0]  %s200, 2048, %s202, [#allocation3], 128, 128, 8
        $region16: #{tpu_custom_call.1} parent=11 // pred_fallthru
          _
      $region12: #{tpu_custom_call.1} parent=5 // pred_fallthru
        _
      %p208 = scmp.lt.s32.totalorder %s17, 2
      // Predicated region
      $region17: #{tpu_custom_call.1} parent=5 // pred_check
        %p209 = pneg %p208
      $region18: #{tpu_custom_call.1} parent=5 // pred_check_branch
        %211 = sbr.rel (%p209) target = $region20
      $region19: #{tpu_custom_call.1} parent=5 // pred_region
        // Predicated region
        $region21: #{tpu_custom_call.1} parent=19 // pred_check
          %p212 = pneg %p86
        $region22: #{tpu_custom_call.1} parent=19 // pred_check_branch
          %214 = sbr.rel (%p212) target = $region24
        $region23: #{tpu_custom_call.1} parent=19 // pred_region
          %s215 = sand.u32 %s17, 1
          %s216 = scalar_lea.sflag [#allocation6], %s215
          %s217 = sand.u32 %s76, 1
          %s218 = smul.addr %s217, 128
          %s219 = scalar_lea.vmem [#allocation5], %s218
          %s220 = smul.u32 32, %s26
          %s222 = ssub.s32 2048, 2048
          %223 = vsyncadd %s216, %s222
          %s224 = smul.addr %s220, 2
          %s225 = sadd.s32 %s25, %s224
          %s226 = smul.addr %s225, 64
          %s227 = scalar_lea.hbm %s1, %s226
          %s228 = sshll.u32 %s219, 4
          %s229 = int_to_ptr.vmem [resolvable:$true] %s228
          %234 = dma.hbm_to_vmem [thread:$0]  %s227, 2048, %s229, %s216, 128, 64, 4
        $region24: #{tpu_custom_call.1} parent=19 // pred_fallthru
          _
        // Predicated region
        $region25: #{tpu_custom_call.1} parent=19 // pred_check
          %p235 = pneg %p112
        $region26: #{tpu_custom_call.1} parent=19 // pred_check_branch
          %237 = sbr.rel (%p235) target = $region28
        $region27: #{tpu_custom_call.1} parent=19 // pred_region
          %p238 = scmp.lt.s32.totalorder %s25, 1
          %s239 = scalar_select %p238, %s25, 1
          %s240 = smul.addr %s239, 2
          %s241 = scalar_lea.vmem %s2, %s240
        $region28: #{tpu_custom_call.1} parent=19 // pred_fallthru
          _
        // Predicated region
        $region29: #{tpu_custom_call.1} parent=19 // pred_check
          %p242 = pneg %p140
        $region30: #{tpu_custom_call.1} parent=19 // pred_check_branch
          %244 = sbr.rel (%p242) target = $region32
        $region31: #{tpu_custom_call.1} parent=19 // pred_region
          %s245 = sand.u32 %s17, 1
          %s246 = scalar_lea.sflag [#allocation6], %s245
          %s247 = sand.u32 %s130, 1
          %s248 = smul.addr %s247, 64
          %s249 = scalar_lea.vmem [#allocation7], %s248
          %s250 = smul.u32 16, %s24
          %s252 = ssub.s32 1024, 1024
          %253 = vsyncadd %s246, %s252
          %s254 = smul.addr %s250, 2
          %s255 = sadd.s32 %s25, %s254
          %s256 = smul.addr %s255, 64
          %s257 = scalar_lea.hbm %s3, %s256
          %s258 = sshll.u32 %s249, 4
          %s259 = int_to_ptr.vmem [resolvable:$true] %s258
          %264 = dma.hbm_to_vmem [thread:$0]  %s257, 1024, %s259, %s246, 128, 64, 4
        $region32: #{tpu_custom_call.1} parent=19 // pred_fallthru
          _
      $region20: #{tpu_custom_call.1} parent=5 // pred_fallthru
        _
      %p265 = scmp.le.s32.totalorder 1, %s17
      %p266 = scmp.lt.s32.totalorder %s17, 3
      %p267 = pnand %p265, %p266
      %p268 = pneg %p267
      // Predicated region
      $region33: #{tpu_custom_call.1} parent=5 // pred_check
        _
      $region34: #{tpu_custom_call.1} parent=5 // pred_check_branch
        %270 = sbr.rel (%p267) target = $region36
      $region35: #{tpu_custom_call.1} parent=5 // pred_region
        %s271 = ssub.s32 %s17, 1
        // Predicated region
        $region37: #{tpu_custom_call.1} parent=35 // pred_check
          %p272 = pneg %p64
        $region38: #{tpu_custom_call.1} parent=35 // pred_check_branch
          %274 = sbr.rel (%p272) target = $region40
        $region39: #{tpu_custom_call.1} parent=35 // pred_region
          %275 = dma.done [#allocation3], 2048
        $region40: #{tpu_custom_call.1} parent=35 // pred_fallthru
          _
        %s276 = sand.u32 %s22, 1
        %s277 = scalar_lea.sflag [#allocation6], %s276
        %s278 = sand.u32 %s79, 1
        %s279 = smul.addr %s278, 128
        %s280 = scalar_lea.vmem [#allocation5], %s279
        // Predicated region
        $region41: #{tpu_custom_call.1} parent=35 // pred_check
          %p281 = pneg %p92
        $region42: #{tpu_custom_call.1} parent=35 // pred_check_branch
          %283 = sbr.rel (%p281) target = $region44
        $region43: #{tpu_custom_call.1} parent=35 // pred_region
          %284 = dma.done %s277, 2048
        $region44: #{tpu_custom_call.1} parent=35 // pred_fallthru
          _
        %s285 = sand.u32 %s22, 1
        %s286 = scalar_lea.sflag [#allocation6], %s285
        %s287 = sand.u32 %s133, 1
        %s288 = smul.addr %s287, 64
        %s289 = scalar_lea.vmem [#allocation7], %s288
        // Predicated region
        $region45: #{tpu_custom_call.1} parent=35 // pred_check
          %p290 = pneg %p146
        $region46: #{tpu_custom_call.1} parent=35 // pred_check_branch
          %292 = sbr.rel (%p290) target = $region48
        $region47: #{tpu_custom_call.1} parent=35 // pred_region
          %293 = dma.done %s286, 1024
        $region48: #{tpu_custom_call.1} parent=35 // pred_fallthru
          _
        %p294 = pneg %p64
        %p295 = pneg %p61
        %s296 = sand.u32 %s22, 1
        %s297 = scalar_lea.sflag [#allocation6], %s296
        %s298 = sand.u32 %s79, 1
        %s299 = smul.addr %s298, 128
        %s300 = scalar_lea.vmem [#allocation5], %s299
        %p301 = pneg %p92
        %p302 = pneg %p89
        %p303 = scmp.lt.s32.totalorder %s28, 1
        %s304 = scalar_select %p303, %s28, 1
        %s305 = smul.addr %s304, 2
        %s306 = scalar_lea.vmem %s2, %s305
        %p307 = pneg %p118
        %p308 = pneg %p115
        %s309 = sand.u32 %s22, 1
        %s310 = scalar_lea.sflag [#allocation6], %s309
        %s311 = sand.u32 %s133, 1
        %s312 = smul.addr %s311, 64
        %s313 = scalar_lea.vmem [#allocation7], %s312
        %p314 = pneg %p146
        %p315 = pneg %p143
        %p316 = pneg %p174
        %p317 = pneg %p171
        %s318 = sand.u32 %s161, 1
        %s319 = scalar_lea.sflag [#allocation4], %s318
        %s320 = sand.u32 %s161, 1
        %s321 = smul.addr %s320, 128
        %s322 = scalar_lea.vmem [#allocation8], %s321
        %s323 = smul.u32 16, %s27
        %s324 = smul.u32 2, %s29
        %s325 = smul.u32 32, %s29
        %p326 = scmp.lt.s32.totalorder %s28, 1
        %s327 = scalar_select %p326, %s28, 1
        %s328 = smul.addr %s327, 2
        %s329 = scalar_lea.vmem %s2, %s328
        %s330 = smul.u32 16, %s27
        %s331 = smul.u32 16, %s27
        %p333 = scmp.eq.s32.totalorder %s29, 0
        // Predicated region
        $region49: #{tpu_custom_call.1} parent=35 // pred_check
          %p334 = pneg %p333
        $region50: #{tpu_custom_call.1} parent=35 // pred_check_branch
          %336 = sbr.rel (%p334) target = $region52
        $region51: #{tpu_custom_call.1} parent=35 // pred_region
          %v337 = vld [vmem:[%s329] sm:$0x1]
          %v338 = vlaneseq
          %v339 = vshrl.u32 %v338, 7
          %v340 = vsub.s32 0, %v339
          %v341 = vrot.slane %v337, %v340
          %342 = vst [vmem:[%s322] sm:$0xff] %v341
          %343 = vst [vmem:[%s322 + $0x8] sm:$0xff] %v341
          %344 = vst [vmem:[%s322 + $0x10] sm:$0xff] %v341
          %345 = vst [vmem:[%s322 + $0x18] sm:$0xff] %v341
          %346 = vst [vmem:[%s322 + $0x20] sm:$0xff] %v341
          %347 = vst [vmem:[%s322 + $0x28] sm:$0xff] %v341
          %348 = vst [vmem:[%s322 + $0x30] sm:$0xff] %v341
          %349 = vst [vmem:[%s322 + $0x38] sm:$0xff] %v341
          %350 = vst [vmem:[%s322 + $0x40] sm:$0xff] %v341
          %351 = vst [vmem:[%s322 + $0x48] sm:$0xff] %v341
          %352 = vst [vmem:[%s322 + $0x50] sm:$0xff] %v341
          %353 = vst [vmem:[%s322 + $0x58] sm:$0xff] %v341
          %354 = vst [vmem:[%s322 + $0x60] sm:$0xff] %v341
          %355 = vst [vmem:[%s322 + $0x68] sm:$0xff] %v341
          %356 = vst [vmem:[%s322 + $0x70] sm:$0xff] %v341
          %357 = vst [vmem:[%s322 + $0x78] sm:$0xff] %v341
        $region52: #{tpu_custom_call.1} parent=35 // pred_fallthru
          _
        %v358 = vld [vmem:[%s322] sm:$0xff]
        %v359 = vld [vmem:[%s322 + $0x8] sm:$0xff]
        %v360 = vld [vmem:[%s322 + $0x10] sm:$0xff]
        %v361 = vld [vmem:[%s322 + $0x18] sm:$0xff]
        %v362 = vld [vmem:[%s322 + $0x20] sm:$0xff]
        %v363 = vld [vmem:[%s322 + $0x28] sm:$0xff]
        %v364 = vld [vmem:[%s322 + $0x30] sm:$0xff]
        %v365 = vld [vmem:[%s322 + $0x38] sm:$0xff]
        %v366 = vld [vmem:[%s322 + $0x40] sm:$0xff]
        %v367 = vld [vmem:[%s322 + $0x48] sm:$0xff]
        %v368 = vld [vmem:[%s322 + $0x50] sm:$0xff]
        %v369 = vld [vmem:[%s322 + $0x58] sm:$0xff]
        %v370 = vld [vmem:[%s322 + $0x60] sm:$0xff]
        %v371 = vld [vmem:[%s322 + $0x68] sm:$0xff]
        %v372 = vld [vmem:[%s322 + $0x70] sm:$0xff]
        %v373 = vld [vmem:[%s322 + $0x78] sm:$0xff]
        %v374 = vld [vmem:[#allocation2] sm:$0xff]
        %v375 = vld [vmem:[#allocation2 + $0x8] sm:$0xff]
        %v376 = vld [vmem:[#allocation2 + $0x10] sm:$0xff]
        %v377 = vld [vmem:[#allocation2 + $0x18] sm:$0xff]
        %v378 = vld [vmem:[#allocation2 + $0x20] sm:$0xff]
        %v379 = vld [vmem:[#allocation2 + $0x28] sm:$0xff]
        %v380 = vld [vmem:[#allocation2 + $0x30] sm:$0xff]
        %v381 = vld [vmem:[#allocation2 + $0x38] sm:$0xff]
        %v382 = vld [vmem:[#allocation2 + $0x40] sm:$0xff]
        %v383 = vld [vmem:[#allocation2 + $0x48] sm:$0xff]
        %v384 = vld [vmem:[#allocation2 + $0x50] sm:$0xff]
        %v385 = vld [vmem:[#allocation2 + $0x58] sm:$0xff]
        %v386 = vld [vmem:[#allocation2 + $0x60] sm:$0xff]
        %v387 = vld [vmem:[#allocation2 + $0x68] sm:$0xff]
        %v388 = vld [vmem:[#allocation2 + $0x70] sm:$0xff]
        %v389 = vld [vmem:[#allocation2 + $0x78] sm:$0xff]
        %v390 = vld [vmem:[%s280] sm:$0xf]
        %v391 = vld [vmem:[%s280 + $0x4] sm:$0xf]
        %v392 = vld [vmem:[%s280 + $0x8] sm:$0xf]
        %v393 = vld [vmem:[%s280 + $0xc] sm:$0xf]
        %v394 = vld [vmem:[%s280 + $0x10] sm:$0xf]
        %v395 = vld [vmem:[%s280 + $0x14] sm:$0xf]
        %v396 = vld [vmem:[%s280 + $0x18] sm:$0xf]
        %v397 = vld [vmem:[%s280 + $0x1c] sm:$0xf]
        %v398 = vld [vmem:[%s280 + $0x20] sm:$0xf]
        %v399 = vld [vmem:[%s280 + $0x24] sm:$0xf]
        %v400 = vld [vmem:[%s280 + $0x28] sm:$0xf]
        %v401 = vld [vmem:[%s280 + $0x2c] sm:$0xf]
        %v402 = vld [vmem:[%s280 + $0x30] sm:$0xf]
        %v403 = vld [vmem:[%s280 + $0x34] sm:$0xf]
        %v404 = vld [vmem:[%s280 + $0x38] sm:$0xf]
        %v405 = vld [vmem:[%s280 + $0x3c] sm:$0xf]
        %v406 = vld [vmem:[%s280 + $0x40] sm:$0xf]
        %v407 = vld [vmem:[%s280 + $0x44] sm:$0xf]
        %v408 = vld [vmem:[%s280 + $0x48] sm:$0xf]
        %v409 = vld [vmem:[%s280 + $0x4c] sm:$0xf]
        %v410 = vld [vmem:[%s280 + $0x50] sm:$0xf]
        %v411 = vld [vmem:[%s280 + $0x54] sm:$0xf]
        %v412 = vld [vmem:[%s280 + $0x58] sm:$0xf]
        %v413 = vld [vmem:[%s280 + $0x5c] sm:$0xf]
        %v414 = vld [vmem:[%s280 + $0x60] sm:$0xf]
        %v415 = vld [vmem:[%s280 + $0x64] sm:$0xf]
        %v416 = vld [vmem:[%s280 + $0x68] sm:$0xf]
        %v417 = vld [vmem:[%s280 + $0x6c] sm:$0xf]
        %v418 = vld [vmem:[%s280 + $0x70] sm:$0xf]
        %v419 = vld [vmem:[%s280 + $0x74] sm:$0xf]
        %v420 = vld [vmem:[%s280 + $0x78] sm:$0xf]
        %v421 = vld [vmem:[%s280 + $0x7c] sm:$0xf]
        %v438 = vunpack.c.l.b16 %v374
        %v439 = vunpack.c.h.b16 %v374
        %v440 = vunpack.c.l.b16 %v375
        %v441 = vunpack.c.h.b16 %v375
        %v442 = vunpack.c.l.b16 %v376
        %v443 = vunpack.c.h.b16 %v376
        %v444 = vunpack.c.l.b16 %v377
        %v445 = vunpack.c.h.b16 %v377
        %v446 = vunpack.c.l.b16 %v378
        %v447 = vunpack.c.h.b16 %v378
        %v448 = vunpack.c.l.b16 %v379
        %v449 = vunpack.c.h.b16 %v379
        %v450 = vunpack.c.l.b16 %v380
        %v451 = vunpack.c.h.b16 %v380
        %v452 = vunpack.c.l.b16 %v381
        %v453 = vunpack.c.h.b16 %v381
        %v454 = vunpack.c.l.b16 %v382
        %v455 = vunpack.c.h.b16 %v382
        %v456 = vunpack.c.l.b16 %v383
        %v457 = vunpack.c.h.b16 %v383
        %v458 = vunpack.c.l.b16 %v384
        %v459 = vunpack.c.h.b16 %v384
        %v460 = vunpack.c.l.b16 %v385
        %v461 = vunpack.c.h.b16 %v385
        %v462 = vunpack.c.l.b16 %v386
        %v463 = vunpack.c.h.b16 %v386
        %v464 = vunpack.c.l.b16 %v387
        %v465 = vunpack.c.h.b16 %v387
        %v466 = vunpack.c.l.b16 %v388
        %v467 = vunpack.c.h.b16 %v388
        %v468 = vunpack.c.l.b16 %v389
        %v469 = vunpack.c.h.b16 %v389
        %v470 = vpack.c.b16 %v440, %v438
        %v471 = vpack.c.b16 %v441, %v439
        %v472 = vpack.c.b16 %v444, %v442
        %v473 = vpack.c.b16 %v445, %v443
        %v474 = vpack.c.b16 %v448, %v446
        %v475 = vpack.c.b16 %v449, %v447
        %v476 = vpack.c.b16 %v452, %v450
        %v477 = vpack.c.b16 %v453, %v451
        %v478 = vpack.c.b16 %v456, %v454
        %v479 = vpack.c.b16 %v457, %v455
        %v480 = vpack.c.b16 %v460, %v458
        %v481 = vpack.c.b16 %v461, %v459
        %v482 = vpack.c.b16 %v464, %v462
        %v483 = vpack.c.b16 %v465, %v463
        %v484 = vpack.c.b16 %v468, %v466
        %v485 = vpack.c.b16 %v469, %v467
        %v534 = vunpack.c.l.b16 %v390
        %v535 = vunpack.c.l.b16 %v391
        %v536 = vunpack.c.l.b16 %v392
        %v537 = vunpack.c.l.b16 %v393
        %v538 = vunpack.c.l.b16 %v394
        %v539 = vunpack.c.l.b16 %v395
        %v540 = vunpack.c.l.b16 %v396
        %v541 = vunpack.c.l.b16 %v397
        %v542 = vunpack.c.l.b16 %v398
        %v543 = vunpack.c.l.b16 %v399
        %v544 = vunpack.c.l.b16 %v400
        %v545 = vunpack.c.l.b16 %v401
        %v546 = vunpack.c.l.b16 %v402
        %v547 = vunpack.c.l.b16 %v403
        %v548 = vunpack.c.l.b16 %v404
        %v549 = vunpack.c.l.b16 %v405
        %v550 = vunpack.c.l.b16 %v406
        %v551 = vunpack.c.l.b16 %v407
        %v552 = vunpack.c.l.b16 %v408
        %v553 = vunpack.c.l.b16 %v409
        %v554 = vunpack.c.l.b16 %v410
        %v555 = vunpack.c.l.b16 %v411
        %v556 = vunpack.c.l.b16 %v412
        %v557 = vunpack.c.l.b16 %v413
        %v558 = vunpack.c.l.b16 %v414
        %v559 = vunpack.c.l.b16 %v415
        %v560 = vunpack.c.l.b16 %v416
        %v561 = vunpack.c.l.b16 %v417
        %v562 = vunpack.c.l.b16 %v418
        %v563 = vunpack.c.l.b16 %v419
        %v564 = vunpack.c.l.b16 %v420
        %v565 = vunpack.c.l.b16 %v421
        %v566 = vpack.c.b16 %v535, %v534
        %v567 = vpack.c.b16 %v537, %v536
        %v568 = vpack.c.b16 %v539, %v538
        %v569 = vpack.c.b16 %v541, %v540
        %v570 = vpack.c.b16 %v543, %v542
        %v571 = vpack.c.b16 %v545, %v544
        %v572 = vpack.c.b16 %v547, %v546
        %v573 = vpack.c.b16 %v549, %v548
        %v574 = vpack.c.b16 %v551, %v550
        %v575 = vpack.c.b16 %v553, %v552
        %v576 = vpack.c.b16 %v555, %v554
        %v577 = vpack.c.b16 %v557, %v556
        %v578 = vpack.c.b16 %v559, %v558
        %v579 = vpack.c.b16 %v561, %v560
        %v580 = vpack.c.b16 %v563, %v562
        %v581 = vpack.c.b16 %v565, %v564
        %598 = vmatprep.subr.bf16.mxu0 0
        %599 = vmatpush1.bf16.msra.mxu0 %v566
        %600 = vmatprep.subr.bf16.mxu0 0
        %601 = vmatpush1.bf16.msra.mxu0 %v567
        %602 = vmatprep.subr.bf16.mxu0 0
        %603 = vmatpush1.bf16.msra.mxu0 %v568
        %604 = vmatprep.subr.bf16.mxu0 0
        %605 = vmatpush1.bf16.msra.mxu0 %v569
        %606 = vmatprep.subr.bf16.mxu0 0
        %607 = vmatpush1.bf16.msra.mxu0 %v570
        %608 = vmatprep.subr.bf16.mxu0 0
        %609 = vmatpush1.bf16.msra.mxu0 %v571
        %610 = vmatprep.subr.bf16.mxu0 0
        %611 = vmatpush1.bf16.msra.mxu0 %v572
        %612 = vmatprep.subr.bf16.mxu0 0
        %613 = vmatpush1.bf16.msra.mxu0 %v573
        %614 = vmatprep.subr.bf16.mxu0 0
        %615 = vmatpush1.bf16.msra.mxu0 %v574
        %616 = vmatprep.subr.bf16.mxu0 0
        %617 = vmatpush1.bf16.msra.mxu0 %v575
        %618 = vmatprep.subr.bf16.mxu0 0
        %619 = vmatpush1.bf16.msra.mxu0 %v576
        %620 = vmatprep.subr.bf16.mxu0 0
        %621 = vmatpush1.bf16.msra.mxu0 %v577
        %622 = vmatprep.subr.bf16.mxu0 0
        %623 = vmatpush1.bf16.msra.mxu0 %v578
        %624 = vmatprep.subr.bf16.mxu0 0
        %625 = vmatpush1.bf16.msra.mxu0 %v579
        %626 = vmatprep.subr.bf16.mxu0 0
        %627 = vmatpush1.bf16.msra.mxu0 %v580
        %628 = vmatprep.subr.bf16.mxu0 0
        %629 = vmatpush1.bf16.msra.mxu0 %v581
        %630 = vmatprep.mubr.bf16.mxu0 %v471
        %631 = vmatmul.mubr.bf16.gmra.mrb[0].mxu0 %v470
        %v632 = vpop.f32.mrb[0].mxu0
        %v633 = vadd.f32 0.0, %v632
        %v634 = vpop.f32.mrb[0].mxu0
        %v635 = vpop.f32.mrb[0].mxu0
        %v636 = vadd.f32 0.0, %v635
        %v637 = vpop.f32.mrb[0].mxu0
        %638 = vmatprep.mubr.bf16.mxu0 %v473
        %639 = vmatmul.mubr.bf16.gmra.mrb[0].mxu0 %v472
        %v640 = vpop.f32.mrb[0].mxu0
        %v641 = vadd.f32 0.0, %v640
        %v642 = vpop.f32.mrb[0].mxu0
        %v643 = vpop.f32.mrb[0].mxu0
        %v644 = vadd.f32 0.0, %v643
        %v645 = vpop.f32.mrb[0].mxu0
        %646 = vmatprep.mubr.bf16.mxu0 %v475
        %647 = vmatmul.mubr.bf16.gmra.mrb[0].mxu0 %v474
        %v648 = vpop.f32.mrb[0].mxu0
        %v649 = vadd.f32 0.0, %v648
        %v650 = vpop.f32.mrb[0].mxu0
        %v651 = vpop.f32.mrb[0].mxu0
        %v652 = vadd.f32 0.0, %v651
        %v653 = vpop.f32.mrb[0].mxu0
        %654 = vmatprep.mubr.bf16.mxu0 %v477
        %655 = vmatmul.mubr.bf16.gmra.mrb[0].mxu0 %v476
        %v656 = vpop.f32.mrb[0].mxu0
        %v657 = vadd.f32 0.0, %v656
        %v658 = vpop.f32.mrb[0].mxu0
        %v659 = vpop.f32.mrb[0].mxu0
        %v660 = vadd.f32 0.0, %v659
        %v661 = vpop.f32.mrb[0].mxu0
        %662 = vmatprep.mubr.bf16.mxu0 %v479
        %663 = vmatmul.mubr.bf16.gmra.mrb[0].mxu0 %v478
        %v664 = vpop.f32.mrb[0].mxu0
        %v665 = vadd.f32 0.0, %v664
        %v666 = vpop.f32.mrb[0].mxu0
        %v667 = vpop.f32.mrb[0].mxu0
        %v668 = vadd.f32 0.0, %v667
        %v669 = vpop.f32.mrb[0].mxu0
        %670 = vmatprep.mubr.bf16.mxu0 %v481
        %671 = vmatmul.mubr.bf16.gmra.mrb[0].mxu0 %v480
        %v672 = vpop.f32.mrb[0].mxu0
        %v673 = vadd.f32 0.0, %v672
        %v674 = vpop.f32.mrb[0].mxu0
        %v675 = vpop.f32.mrb[0].mxu0
        %v676 = vadd.f32 0.0, %v675
        %v677 = vpop.f32.mrb[0].mxu0
        %678 = vmatprep.mubr.bf16.mxu0 %v483
        %679 = vmatmul.mubr.bf16.gmra.mrb[0].mxu0 %v482
        %v680 = vpop.f32.mrb[0].mxu0
        %v681 = vadd.f32 0.0, %v680
        %v682 = vpop.f32.mrb[0].mxu0
        %v683 = vpop.f32.mrb[0].mxu0
        %v684 = vadd.f32 0.0, %v683
        %v685 = vpop.f32.mrb[0].mxu0
        %686 = vmatprep.mubr.bf16.mxu0 %v485
        %687 = vmatmul.mubr.bf16.gmra.mrb[0].mxu0 %v484
        %v688 = vpop.f32.mrb[0].mxu0
        %v689 = vadd.f32 0.0, %v688
        %v690 = vpop.f32.mrb[0].mxu0
        %v691 = vpop.f32.mrb[0].mxu0
        %v692 = vadd.f32 0.0, %v691
        %v693 = vpop.f32.mrb[0].mxu0
        %694 = vdwg.mxu0
        %v695 = vadd.f32 %v358, %v633
        %v696 = vadd.f32 %v359, %v636
        %v697 = vadd.f32 %v360, %v641
        %v698 = vadd.f32 %v361, %v644
        %v699 = vadd.f32 %v362, %v649
        %v700 = vadd.f32 %v363, %v652
        %v701 = vadd.f32 %v364, %v657
        %v702 = vadd.f32 %v365, %v660
        %v703 = vadd.f32 %v366, %v665
        %v704 = vadd.f32 %v367, %v668
        %v705 = vadd.f32 %v368, %v673
        %v706 = vadd.f32 %v369, %v676
        %v707 = vadd.f32 %v370, %v681
        %v708 = vadd.f32 %v371, %v684
        %v709 = vadd.f32 %v372, %v689
        %v710 = vadd.f32 %v373, %v692
        %711 = vst [vmem:[%s322] sm:$0xff] %v695
        %712 = vst [vmem:[%s322 + $0x8] sm:$0xff] %v696
        %713 = vst [vmem:[%s322 + $0x10] sm:$0xff] %v697
        %714 = vst [vmem:[%s322 + $0x18] sm:$0xff] %v698
        %715 = vst [vmem:[%s322 + $0x20] sm:$0xff] %v699
        %716 = vst [vmem:[%s322 + $0x28] sm:$0xff] %v700
        %717 = vst [vmem:[%s322 + $0x30] sm:$0xff] %v701
        %718 = vst [vmem:[%s322 + $0x38] sm:$0xff] %v702
        %719 = vst [vmem:[%s322 + $0x40] sm:$0xff] %v703
        %720 = vst [vmem:[%s322 + $0x48] sm:$0xff] %v704
        %721 = vst [vmem:[%s322 + $0x50] sm:$0xff] %v705
        %722 = vst [vmem:[%s322 + $0x58] sm:$0xff] %v706
        %723 = vst [vmem:[%s322 + $0x60] sm:$0xff] %v707
        %724 = vst [vmem:[%s322 + $0x68] sm:$0xff] %v708
        %725 = vst [vmem:[%s322 + $0x70] sm:$0xff] %v709
        %726 = vst [vmem:[%s322 + $0x78] sm:$0xff] %v710
        // Predicated region
        $region53: #{tpu_custom_call.1} parent=35 // pred_check
          %p727 = pneg %p333
        $region54: #{tpu_custom_call.1} parent=35 // pred_check_branch
          %729 = sbr.rel (%p727) target = $region56
        $region55: #{tpu_custom_call.1} parent=35 // pred_region
          %v730 = vld [vmem:[%s322] sm:$0xff]
          %v731 = vld [vmem:[%s322 + $0x8] sm:$0xff]
          %v732 = vld [vmem:[%s322 + $0x10] sm:$0xff]
          %v733 = vld [vmem:[%s322 + $0x18] sm:$0xff]
          %v734 = vld [vmem:[%s322 + $0x20] sm:$0xff]
          %v735 = vld [vmem:[%s322 + $0x28] sm:$0xff]
          %v736 = vld [vmem:[%s322 + $0x30] sm:$0xff]
          %v737 = vld [vmem:[%s322 + $0x38] sm:$0xff]
          %v738 = vld [vmem:[%s322 + $0x40] sm:$0xff]
          %v739 = vld [vmem:[%s322 + $0x48] sm:$0xff]
          %v740 = vld [vmem:[%s322 + $0x50] sm:$0xff]
          %v741 = vld [vmem:[%s322 + $0x58] sm:$0xff]
          %v742 = vld [vmem:[%s322 + $0x60] sm:$0xff]
          %v743 = vld [vmem:[%s322 + $0x68] sm:$0xff]
          %v744 = vld [vmem:[%s322 + $0x70] sm:$0xff]
          %v745 = vld [vmem:[%s322 + $0x78] sm:$0xff]
          %v746 = vld [vmem:[%s329 + $0x1] sm:$0x1]
          %v747 = vld [vmem:[%s289] sm:$0xf]
          %v748 = vld [vmem:[%s289 + $0x4] sm:$0xf]
          %v749 = vld [vmem:[%s289 + $0x8] sm:$0xf]
          %v750 = vld [vmem:[%s289 + $0xc] sm:$0xf]
          %v751 = vld [vmem:[%s289 + $0x10] sm:$0xf]
          %v752 = vld [vmem:[%s289 + $0x14] sm:$0xf]
          %v753 = vld [vmem:[%s289 + $0x18] sm:$0xf]
          %v754 = vld [vmem:[%s289 + $0x1c] sm:$0xf]
          %v755 = vld [vmem:[%s289 + $0x20] sm:$0xf]
          %v756 = vld [vmem:[%s289 + $0x24] sm:$0xf]
          %v757 = vld [vmem:[%s289 + $0x28] sm:$0xf]
          %v758 = vld [vmem:[%s289 + $0x2c] sm:$0xf]
          %v759 = vld [vmem:[%s289 + $0x30] sm:$0xf]
          %v760 = vld [vmem:[%s289 + $0x34] sm:$0xf]
          %v761 = vld [vmem:[%s289 + $0x38] sm:$0xf]
          %v762 = vld [vmem:[%s289 + $0x3c] sm:$0xf]
          %v763 = vunpack.c.l.bf16 %v747
          %v764 = vunpack.c.l.bf16 %v748
          %v765 = vunpack.c.l.bf16 %v749
          %v766 = vunpack.c.l.bf16 %v750
          %v767 = vunpack.c.l.bf16 %v751
          %v768 = vunpack.c.l.bf16 %v752
          %v769 = vunpack.c.l.bf16 %v753
          %v770 = vunpack.c.l.bf16 %v754
          %v771 = vunpack.c.l.bf16 %v755
          %v772 = vunpack.c.l.bf16 %v756
          %v773 = vunpack.c.l.bf16 %v757
          %v774 = vunpack.c.l.bf16 %v758
          %v775 = vunpack.c.l.bf16 %v759
          %v776 = vunpack.c.l.bf16 %v760
          %v777 = vunpack.c.l.bf16 %v761
          %v778 = vunpack.c.l.bf16 %v762
          %v779 = vlaneseq
          %v780 = vshrl.u32 %v779, 7
          %v781 = vsub.s32 0, %v780
          %v782 = vrot.slane %v746, %v781
          %v783 = vmul.f32 %v782, %v763
          %v784 = vmul.f32 %v782, %v764
          %v785 = vmul.f32 %v782, %v765
          %v786 = vmul.f32 %v782, %v766
          %v787 = vmul.f32 %v782, %v767
          %v788 = vmul.f32 %v782, %v768
          %v789 = vmul.f32 %v782, %v769
          %v790 = vmul.f32 %v782, %v770
          %v791 = vmul.f32 %v782, %v771
          %v792 = vmul.f32 %v782, %v772
          %v793 = vmul.f32 %v782, %v773
          %v794 = vmul.f32 %v782, %v774
          %v795 = vmul.f32 %v782, %v775
          %v796 = vmul.f32 %v782, %v776
          %v797 = vmul.f32 %v782, %v777
          %v798 = vmul.f32 %v782, %v778
          %v799 = vadd.f32 %v730, %v783
          %v800 = vadd.f32 %v731, %v784
          %v801 = vadd.f32 %v732, %v785
          %v802 = vadd.f32 %v733, %v786
          %v803 = vadd.f32 %v734, %v787
          %v804 = vadd.f32 %v735, %v788
          %v805 = vadd.f32 %v736, %v789
          %v806 = vadd.f32 %v737, %v790
          %v807 = vadd.f32 %v738, %v791
          %v808 = vadd.f32 %v739, %v792
          %v809 = vadd.f32 %v740, %v793
          %v810 = vadd.f32 %v741, %v794
          %v811 = vadd.f32 %v742, %v795
          %v812 = vadd.f32 %v743, %v796
          %v813 = vadd.f32 %v744, %v797
          %v814 = vadd.f32 %v745, %v798
          %815 = vst [vmem:[%s322] sm:$0xff] %v799
          %816 = vst [vmem:[%s322 + $0x8] sm:$0xff] %v800
          %817 = vst [vmem:[%s322 + $0x10] sm:$0xff] %v801
          %818 = vst [vmem:[%s322 + $0x18] sm:$0xff] %v802
          %819 = vst [vmem:[%s322 + $0x20] sm:$0xff] %v803
          %820 = vst [vmem:[%s322 + $0x28] sm:$0xff] %v804
          %821 = vst [vmem:[%s322 + $0x30] sm:$0xff] %v805
          %822 = vst [vmem:[%s322 + $0x38] sm:$0xff] %v806
          %823 = vst [vmem:[%s322 + $0x40] sm:$0xff] %v807
          %824 = vst [vmem:[%s322 + $0x48] sm:$0xff] %v808
          %825 = vst [vmem:[%s322 + $0x50] sm:$0xff] %v809
          %826 = vst [vmem:[%s322 + $0x58] sm:$0xff] %v810
          %827 = vst [vmem:[%s322 + $0x60] sm:$0xff] %v811
          %828 = vst [vmem:[%s322 + $0x68] sm:$0xff] %v812
          %829 = vst [vmem:[%s322 + $0x70] sm:$0xff] %v813
          %830 = vst [vmem:[%s322 + $0x78] sm:$0xff] %v814
        $region56: #{tpu_custom_call.1} parent=35 // pred_fallthru
          _
        %s831 = sand.u32 %s161, 1
        %s832 = scalar_lea.sflag [#allocation4], %s831
        %s833 = sand.u32 %s161, 1
        %s834 = smul.addr %s833, 128
        %s835 = scalar_lea.vmem [#allocation8], %s834
        // Predicated region
        $region57: #{tpu_custom_call.1} parent=35 // pred_check
          %p836 = pneg %p171
        $region58: #{tpu_custom_call.1} parent=35 // pred_check_branch
          %838 = sbr.rel (%p836) target = $region60
        $region59: #{tpu_custom_call.1} parent=35 // pred_region
          %s839 = smul.u32 16, %s27
          %s841 = ssub.s32 2048, 2048
          %842 = vsyncadd %s832, %s841
          %s843 = smul.addr %s839, 2
          %s844 = sadd.s32 %s28, %s843
          %s845 = smul.addr %s844, 128
          %s846 = scalar_lea.hbm %s4, %s845
          %s847 = sshll.u32 %s835, 4
          %s848 = int_to_ptr.vmem [resolvable:$true] %s847
          %853 = dma.vmem_to_hbm [thread:$0]  %s848, 2048, %s846, %s832, 128, 256, 8
        $region60: #{tpu_custom_call.1} parent=35 // pred_fallthru
          _
      $region36: #{tpu_custom_call.1} parent=5 // pred_fallthru
        _
      %p854 = scmp.le.s32.totalorder 2, %s17
      // Predicated region
      $region61: #{tpu_custom_call.1} parent=5 // pred_check
        %p855 = pneg %p854
      $region62: #{tpu_custom_call.1} parent=5 // pred_check_branch
        %857 = sbr.rel (%p855) target = $region64
      $region63: #{tpu_custom_call.1} parent=5 // pred_region
        %s858 = ssub.s32 %s17, 2
        // Predicated region
        $region65: #{tpu_custom_call.1} parent=63 // pred_check
          %p859 = pneg %p177
        $region66: #{tpu_custom_call.1} parent=63 // pred_check_branch
          %861 = sbr.rel (%p859) target = $region68
        $region67: #{tpu_custom_call.1} parent=63 // pred_region
          %s862 = sand.u32 %s162, 1
          %s863 = scalar_lea.sflag [#allocation4], %s862
          %s864 = sand.u32 %s162, 1
          %s865 = smul.addr %s864, 128
          %s866 = scalar_lea.vmem [#allocation8], %s865
          %867 = dma.done %s863, 2048
        $region68: #{tpu_custom_call.1} parent=63 // pred_fallthru
          _
      $region64: #{tpu_custom_call.1} parent=5 // pred_fallthru
        _
    $region6: #{tpu_custom_call.1} parent=1 // loop_footer
      %s21 = sadd.s32 1, %s17
    $region7: #{tpu_custom_call.1} parent=1 // loop_footer_branch
      %16 = sbr.rel target = $region3
    $region8: #{tpu_custom_call.1} parent=1 // loop_exit
      _
    %868 = vsyncpa [#allocation3], 1
    %s869 = scalar_lea.sflag [#allocation3], 1
    %870 = vsyncpa %s869, 1
    %871 = vsyncpa [#allocation6], 1
    %s872 = scalar_lea.sflag [#allocation6], 1
    %873 = vsyncpa %s872, 1
    %874 = vsyncpa [#allocation4], 1
    %s875 = scalar_lea.sflag [#allocation4], 1
    %876 = vsyncpa %s875, 1

</llo_original>
